<compile_context>
chip_gen: v6e
topology: v6e:2x2x1
jax: 0.10.0
libtpu: 0.0.40
codegen_flags: <defaults>
</compile_context>

<pallas_src>
import functools

import jax
import jax.numpy as jnp
from jax.experimental import pallas as pl
from jax.experimental.pallas import tpu as pltpu

_LANE = 128
_CHUNK_LANES = 512  # per-chunk intermediates [hidden, 512] f32 stay comfortably in vregs


def mixer_kernel(qt_ref, w1_ref, b1_ref, w2_ref, b2_ref, out_ref, *, chunk):
    """One batch tile of the mixer: FC1 (n_agents->hidden) -> ReLU -> FC2 (hidden->1).

    Layout: batch along lanes. qt tile is [n_agents, tb]; out tile is [1, tb].
    Weights/biases are VMEM-resident across grid steps; b2 is an SMEM scalar.
    """
    n_agents = w1_ref.shape[1]
    tb = out_ref.shape[1]
    num_chunks = tb // chunk

    # Hoisted, chunk-loop-invariant weight loads (do NOT re-materialize these per chunk).
    w1_cols = [w1_ref[:, k:k + 1] for k in range(n_agents)]  # each [hidden, 1]
    b1 = b1_ref[...]                                         # [hidden, 1]
    w2 = w2_ref[...]                                         # [hidden, 1] (fc2.weight^T)
    b2 = b2_ref[0]                                           # scalar from SMEM

    # Fully-unrolled static chunk loop (equivalent to lax.fori_loop(..., unroll=True)
    # with static bounds): each chunk's FC1->ReLU->FC2 chain stays in vregs, avoiding
    # [hidden, tb] VMEM temporaries and the vld/vst ping-pong they cause.
    for c in range(num_chunks):
        off = c * chunk  # static, lane-aligned offset
        # FC1: n_agents broadcast multiply-adds on the VPU (an MXU matmul at K=4, N=32
        # would run at <5% utilization; the VPU path uses otherwise-idle slots).
        acc = b1 + w1_cols[0] * qt_ref[0:1, pl.ds(off, chunk)]
        for k in range(1, n_agents):
            acc = acc + w1_cols[k] * qt_ref[k:k + 1, pl.ds(off, chunk)]
        h = jnp.maximum(acc, 0.0)                            # ReLU, [hidden, chunk]
        # FC2 (hidden -> 1): VPU multiply + XLU sublane reduce; lane-dense [1, chunk].
        y = jnp.sum(h * w2, axis=0, keepdims=True) + b2
        out_ref[:, pl.ds(off, chunk)] = y.astype(out_ref.dtype)


def _round_up(x, m):
    return (x + m - 1) // m * m


def mixer_forward(q_values, w1, b1, w2, b2, *, tile_b=16384):
    """QMIX mixer forward.

    q_values: [B, n_agents] f32
    w1: [hidden, n_agents]  (PyTorch fc1.weight)
    b1: [hidden]            (fc1.bias)
    w2: [1, hidden]         (fc2.weight)
    b2: [1]                 (fc2.bias)
    returns total_q: [B, 1] f32
    """
    B, n_agents = q_values.shape
    hidden = w1.shape[0]
    assert w1.shape == (hidden, n_agents)
    assert b1.shape == (hidden,)
    assert w2.shape == (1, hidden)
    assert b2.shape == (1,)

    if B == 0:
        return jnp.zeros((0, 1), jnp.float32)

    # --- Tile / chunk selection -------------------------------------------------------
    b_lanes = _round_up(B, _LANE)
    chunk = min(_CHUNK_LANES, b_lanes, _round_up(tile_b, _LANE))
    tile_cap = max(_round_up(min(tile_b, b_lanes), chunk), chunk)
    n_chunks_total = pl.cdiv(b_lanes, chunk)
    chunks_per_tile = min(tile_cap // chunk, n_chunks_total)
    # v7x has 2 TensorCores: keep >= 2 batch tiles when there is enough work so the
    # "parallel" grid axis can feed both; on v5e/v6e this only adds one cheap grid step.
    if n_chunks_total >= 2 and chunks_per_tile >= n_chunks_total:
        chunks_per_tile = pl.cdiv(n_chunks_total, 2)
    num_tiles = pl.cdiv(n_chunks_total, chunks_per_tile)
    chunks_per_tile = pl.cdiv(n_chunks_total, num_tiles)  # rebalance: no all-padding last tile
    tb = chunks_per_tile * chunk
    b_pad = num_tiles * tb

    # --- Batch-on-lanes layout --------------------------------------------------------
    # TODO(synk): this transpose (+pad) is a separate XLA HBM relayout pass; for best
    # performance have the producer emit q_values as [n_agents, B] or fuse the mixer
    # into the producing kernel so the relayout never touches HBM.
    qt = jnp.transpose(q_values)  # [n_agents, B]
    if b_pad != B:
        qt = jnp.pad(qt, ((0, 0), (0, b_pad - B)))  # padded columns are sliced off below

    kernel = functools.partial(mixer_kernel, chunk=chunk)
    out = pl.pallas_call(
        kernel,
        out_shape=jax.ShapeDtypeStruct((1, b_pad), jnp.float32),
        grid=(num_tiles,),
        in_specs=[
            pl.BlockSpec((n_agents, tb), lambda i: (0, i)),        # streamed q tile
            pl.BlockSpec((hidden, n_agents), lambda i: (0, 0)),    # resident fc1.weight
            pl.BlockSpec((hidden, 1), lambda i: (0, 0)),           # resident fc1.bias
            pl.BlockSpec((hidden, 1), lambda i: (0, 0)),           # resident fc2.weight^T
            pl.BlockSpec(memory_space=pltpu.MemorySpace.SMEM),     # fc2.bias scalar
        ],
        out_specs=pl.BlockSpec((1, tb), lambda i: (0, i)),          # lane-dense output row
        compiler_params=pltpu.CompilerParams(
            dimension_semantics=("parallel",),  # batch tiles shard across v7x's 2 TCs
        ),
    )(qt, w1, b1.reshape(hidden, 1), w2.reshape(hidden, 1), b2)

    return out[0, :B].reshape(B, 1)


if __name__ == "__main__":
    n_agents = 4
    state_dim = 16      # present in the PyTorch ctor but unused by forward()
    hidden_dim = 32
    batch = 8

    key = jax.random.PRNGKey(0)
    k_x, kw1, kb1, kw2, kb2, k_x2, k_x3 = jax.random.split(key, 7)

    # nn.Linear-style uniform(-1/sqrt(fan_in), 1/sqrt(fan_in)) init, PyTorch layouts.
    bound1 = 1.0 / float(n_agents) ** 0.5
    bound2 = 1.0 / float(hidden_dim) ** 0.5
    w1 = jax.random.uniform(kw1, (hidden_dim, n_agents), jnp.float32, -bound1, bound1)
    b1 = jax.random.uniform(kb1, (hidden_dim,), jnp.float32, -bound1, bound1)
    w2 = jax.random.uniform(kw2, (1, hidden_dim), jnp.float32, -bound2, bound2)
    b2 = jax.random.uniform(kb2, (1,), jnp.float32, -bound2, bound2)

    def ref_forward(q):
        h = jnp.maximum(q @ w1.T + b1[None, :], 0.0)
        return h @ w2.T + b2[None, :]

    # Small demo batch (single tile, single chunk).
    q_values = jax.random.normal(k_x, (batch, n_agents), dtype=jnp.float32)
    total_q = jax.block_until_ready(mixer_forward(q_values, w1, b1, w2, b2))
    assert total_q.shape == (batch, 1)
    assert jnp.allclose(total_q, ref_forward(q_values), atol=1e-5, rtol=1e-5)

    # Multi-tile path (grid > 1, padded batch) to exercise the tiled/parallel axis.
    q_big = jax.random.normal(k_x2, (300, n_agents), dtype=jnp.float32)
    total_q_big = jax.block_until_ready(
        mixer_forward(q_big, w1, b1, w2, b2, tile_b=128)
    )
    assert total_q_big.shape == (300, 1)
    assert jnp.allclose(total_q_big, ref_forward(q_big), atol=1e-5, rtol=1e-5)

    # Default tiling path: multiple in-kernel chunks per tile + 2 tiles + padding.
    q_med = jax.random.normal(k_x3, (3000, n_agents), dtype=jnp.float32)
    total_q_med = jax.block_until_ready(mixer_forward(q_med, w1, b1, w2, b2))
    assert total_q_med.shape == (3000, 1)
    assert jnp.allclose(total_q_med, ref_forward(q_med), atol=1e-5, rtol=1e-5)

    print("KERNEL_OK")
</pallas_src>

<mosaic_0001>
module attributes {stable_mosaic.version = 11 : i64} {
  func.func @mixer_kernel(%arg0: i32, %arg1: memref<4x128xf32, #tpu.memory_space<vmem>>, %arg2: memref<32x4xf32, #tpu.memory_space<vmem>>, %arg3: memref<32x1xf32, #tpu.memory_space<vmem>>, %arg4: memref<32x1xf32, #tpu.memory_space<vmem>>, %arg5: memref<1xf32, #tpu.memory_space<smem>>, %arg6: memref<1x128xf32, #tpu.memory_space<vmem>>) attributes {dimension_semantics = [#tpu.dimension_semantics<parallel>], iteration_bounds = array<i64: 1>, scalar_prefetch = 0 : i64, scratch_operands = 0 : i64, tpu.core_type = #tpu.core_type<tc>, window_params = [{transform_indices = @transform_0, window_bounds = array<i64: 4, 128>}, {pipeline_mode = #tpu.pipeline_mode<synchronous>, transform_indices = @transform_1, window_bounds = array<i64: 32, 4>}, {pipeline_mode = #tpu.pipeline_mode<synchronous>, transform_indices = @transform_2, window_bounds = array<i64: 32, 1>}, {pipeline_mode = #tpu.pipeline_mode<synchronous>, transform_indices = @transform_3, window_bounds = array<i64: 32, 1>}, {transform_indices = @transform_4, window_bounds = array<i64: 1>}, {transform_indices = @transform_5, window_bounds = array<i64: 1, 128>}]} {
    %c0 = arith.constant 0 : index
    %c0_0 = arith.constant 0 : index
    %0 = vector.load %arg2[%c0, %c0_0] : memref<32x4xf32, #tpu.memory_space<vmem>>, vector<32x1xf32>
    %c0_1 = arith.constant 0 : index
    %c1 = arith.constant 1 : index
    %1 = vector.load %arg2[%c0_1, %c1] : memref<32x4xf32, #tpu.memory_space<vmem>>, vector<32x1xf32>
    %c0_2 = arith.constant 0 : index
    %c2 = arith.constant 2 : index
    %2 = vector.load %arg2[%c0_2, %c2] : memref<32x4xf32, #tpu.memory_space<vmem>>, vector<32x1xf32>
    %c0_3 = arith.constant 0 : index
    %c3 = arith.constant 3 : index
    %3 = vector.load %arg2[%c0_3, %c3] : memref<32x4xf32, #tpu.memory_space<vmem>>, vector<32x1xf32>
    %c0_4 = arith.constant 0 : index
    %c0_5 = arith.constant 0 : index
    %4 = vector.load %arg3[%c0_4, %c0_5] : memref<32x1xf32, #tpu.memory_space<vmem>>, vector<32x1xf32>
    %c0_6 = arith.constant 0 : index
    %c0_7 = arith.constant 0 : index
    %5 = vector.load %arg4[%c0_6, %c0_7] : memref<32x1xf32, #tpu.memory_space<vmem>>, vector<32x1xf32>
    %c0_8 = arith.constant 0 : index
    %6 = memref.load %arg5[%c0_8] : memref<1xf32, #tpu.memory_space<smem>>
    %c0_9 = arith.constant 0 : index
    %c0_10 = arith.constant 0 : index
    %7 = vector.load %arg1[%c0_9, %c0_10] : memref<4x128xf32, #tpu.memory_space<vmem>>, vector<1x128xf32>
    %8 = vector.broadcast %0 : vector<32x1xf32> to vector<32x128xf32>
    %9 = vector.broadcast %7 : vector<1x128xf32> to vector<32x128xf32>
    %10 = arith.mulf %8, %9 : vector<32x128xf32>
    %11 = vector.broadcast %4 : vector<32x1xf32> to vector<32x128xf32>
    %12 = arith.addf %11, %10 : vector<32x128xf32>
    %c1_11 = arith.constant 1 : index
    %c0_12 = arith.constant 0 : index
    %13 = vector.load %arg1[%c1_11, %c0_12] : memref<4x128xf32, #tpu.memory_space<vmem>>, vector<1x128xf32>
    %14 = vector.broadcast %1 : vector<32x1xf32> to vector<32x128xf32>
    %15 = vector.broadcast %13 : vector<1x128xf32> to vector<32x128xf32>
    %16 = arith.mulf %14, %15 : vector<32x128xf32>
    %17 = arith.addf %12, %16 : vector<32x128xf32>
    %c2_13 = arith.constant 2 : index
    %c0_14 = arith.constant 0 : index
    %18 = vector.load %arg1[%c2_13, %c0_14] : memref<4x128xf32, #tpu.memory_space<vmem>>, vector<1x128xf32>
    %19 = vector.broadcast %2 : vector<32x1xf32> to vector<32x128xf32>
    %20 = vector.broadcast %18 : vector<1x128xf32> to vector<32x128xf32>
    %21 = arith.mulf %19, %20 : vector<32x128xf32>
    %22 = arith.addf %17, %21 : vector<32x128xf32>
    %c3_15 = arith.constant 3 : index
    %c0_16 = arith.constant 0 : index
    %23 = vector.load %arg1[%c3_15, %c0_16] : memref<4x128xf32, #tpu.memory_space<vmem>>, vector<1x128xf32>
    %24 = vector.broadcast %3 : vector<32x1xf32> to vector<32x128xf32>
    %25 = vector.broadcast %23 : vector<1x128xf32> to vector<32x128xf32>
    %26 = arith.mulf %24, %25 : vector<32x128xf32>
    %27 = arith.addf %22, %26 : vector<32x128xf32>
    %cst = arith.constant 0.000000e+00 : f32
    %28 = vector.broadcast %cst : f32 to vector<32x128xf32>
    %29 = arith.maximumf %27, %28 : vector<32x128xf32>
    %30 = vector.broadcast %5 : vector<32x1xf32> to vector<32x128xf32>
    %31 = arith.mulf %29, %30 : vector<32x128xf32>
    %cst_17 = arith.constant dense<0.000000e+00> : vector<128xf32>
    %32 = vector.multi_reduction <add>, %31, %cst_17 [0] : vector<32x128xf32> to vector<128xf32>
    %33 = vector.shape_cast %32 : vector<128xf32> to vector<1x128xf32>
    %34 = vector.broadcast %6 : f32 to vector<1x128xf32>
    %35 = arith.addf %33, %34 : vector<1x128xf32>
    %c0_18 = arith.constant 0 : index
    %c0_19 = arith.constant 0 : index
    %36 = vector.load %arg6[%c0_18, %c0_19] : memref<1x128xf32, #tpu.memory_space<vmem>>, vector<1x128xf32>
    tpu.vector_store %arg6[%c0_18, %c0_19], %35 {strides = array<i32>} : memref<1x128xf32, #tpu.memory_space<vmem>>, vector<1x128xf32>,
    return
  }
  func.func @transform_0(%arg0: i32) -> (i32, i32) {
    %c0_i32 = arith.constant 0 : i32
    %c0_i32_0 = arith.constant 0 : i32
    return %c0_i32, %arg0 : i32, i32
  }
  func.func @transform_1(%arg0: i32) -> (i32, i32) {
    %c0_i32 = arith.constant 0 : i32
    %c0_i32_0 = arith.constant 0 : i32
    %c0_i32_1 = arith.constant 0 : i32
    return %c0_i32, %c0_i32_0 : i32, i32
  }
  func.func @transform_2(%arg0: i32) -> (i32, i32) {
    %c0_i32 = arith.constant 0 : i32
    %c0_i32_0 = arith.constant 0 : i32
    %c0_i32_1 = arith.constant 0 : i32
    return %c0_i32, %c0_i32_0 : i32, i32
  }
  func.func @transform_3(%arg0: i32) -> (i32, i32) {
    %c0_i32 = arith.constant 0 : i32
    %c0_i32_0 = arith.constant 0 : i32
    %c0_i32_1 = arith.constant 0 : i32
    return %c0_i32, %c0_i32_0 : i32, i32
  }
  func.func @transform_4(%arg0: i32) -> i32 {
    %c0_i32 = arith.constant 0 : i32
    %c0_i32_0 = arith.constant 0 : i32
    return %c0_i32 : i32
  }
  func.func @transform_5(%arg0: i32) -> (i32, i32) {
    %c0_i32 = arith.constant 0 : i32
    %c0_i32_0 = arith.constant 0 : i32
    return %c0_i32, %arg0 : i32, i32
  }
}

</mosaic_0001>

<llo_original>
// kernel: tpu_custom_call.1
$region0: #{tpu_custom_call.1}
  #allocation0 [shape = 'u32[]', space=smem, size = 0x4, offset = 0x4, fixed_abs, tag = 'smem constant byte address 0x4 - core index']
  #allocation1 [shape = 'u32[144,128]{1,0:T(1,128)}', space=vmem, size = 0x12000, scoped, tag = 'internal scratch']
  #allocation2 [shape = 'f32[1]{0:T(128)S(6)}', space=smem, size = 0x200, scoped, tag = 'scoped memory for tpu_custom_call.1']
  %s0 = inlined_call_operand.vmem [shape: f32[4,128], index: 0, kind: input, shape index: {}]
  %s1 = inlined_call_operand.vmem [shape: f32[32,4], index: 1, kind: input, shape index: {}]
  %s2 = inlined_call_operand.vmem [shape: f32[32,1], index: 2, kind: input, shape index: {}]
  %s3 = inlined_call_operand.vmem [shape: f32[32,1], index: 3, kind: input, shape index: {}]
  %s4 = inlined_call_operand.<no memory space> [shape: f32[1], index: 4, kind: input, shape index: {}]
  %s5 = inlined_call_operand.hbm [shape: f32[1,128], index: 5, kind: output, shape index: {}]
  %s6 = sld [smem:[#allocation0]]
  $region30: #{tpu_custom_call.1} parent=0
    _
  %s8 = ssub.s32 1, %s6
  %s9 = scalar_select 0, %s8, %s6
  %10 = sst [smem:[#allocation2]] %s4
  $region1: #{tpu_custom_call.1} parent=0
    #allocation3 [shape = 'u8[512]{0}', space=vmem, size = 0x400, scoped, tag = 'output window, operand 0, single buffered']
    #allocation4 [shape = 's32[1]{0}', space=sflag, size = 0x4, scoped, tag = 'scoped memory for tpu_custom_call.1']
    %11 = vsyncpa [#allocation4], 0
    // Predicated region
    $region2: #{tpu_custom_call.1} parent=1 // pred_check
      _
    $region3: #{tpu_custom_call.1} parent=1 // pred_check_branch
      %13 = sbr.rel (0) target = $region5
    $region4: #{tpu_custom_call.1} parent=1 // pred_region
      _
    $region5: #{tpu_custom_call.1} parent=1 // pred_fallthru
      _
    // Predicated region
    $region6: #{tpu_custom_call.1} parent=1 // pred_check
      _
    $region7: #{tpu_custom_call.1} parent=1 // pred_check_branch
      %15 = sbr.rel (0) target = $region9
    $region8: #{tpu_custom_call.1} parent=1 // pred_region
      _
    $region9: #{tpu_custom_call.1} parent=1 // pred_fallthru
      _
    // Predicated region
    $region10: #{tpu_custom_call.1} parent=1 // pred_check
      _
    $region11: #{tpu_custom_call.1} parent=1 // pred_check_branch
      %17 = sbr.rel (0) target = $region13
    $region12: #{tpu_custom_call.1} parent=1 // pred_region
      _
    $region13: #{tpu_custom_call.1} parent=1 // pred_fallthru
      _
    // Predicated region
    $region14: #{tpu_custom_call.1} parent=1 // pred_check
      _
    $region15: #{tpu_custom_call.1} parent=1 // pred_check_branch
      %19 = sbr.rel (0) target = $region17
    $region16: #{tpu_custom_call.1} parent=1 // pred_region
      _
    $region17: #{tpu_custom_call.1} parent=1 // pred_fallthru
      _
    // Predicated region
    $region18: #{tpu_custom_call.1} parent=1 // pred_check
      _
    $region19: #{tpu_custom_call.1} parent=1 // pred_check_branch
      %21 = sbr.rel (0) target = $region21
    $region20: #{tpu_custom_call.1} parent=1 // pred_region
      _
    $region21: #{tpu_custom_call.1} parent=1 // pred_fallthru
      _
    %v22 = vld [vmem:[%s1] sm:$0xff]
    %v23 = vld [vmem:[%s1 + $0x8] sm:$0xff]
    %v24 = vld [vmem:[%s1 + $0x10] sm:$0xff]
    %v25 = vld [vmem:[%s1 + $0x18] sm:$0xff]
    %v26 = vld [vmem:[%s2] sm:$0xff]
    %v27 = vld [vmem:[%s2 + $0x8] sm:$0xff]
    %v28 = vld [vmem:[%s2 + $0x10] sm:$0xff]
    %v29 = vld [vmem:[%s2 + $0x18] sm:$0xff]
    %v30 = vld [vmem:[%s3] sm:$0xff]
    %v31 = vld [vmem:[%s3 + $0x8] sm:$0xff]
    %v32 = vld [vmem:[%s3 + $0x10] sm:$0xff]
    %v33 = vld [vmem:[%s3 + $0x18] sm:$0xff]
    %s34 = sld [smem:[#allocation2]]
    %v35 = vld [vmem:[%s0] sm:$0x1]
    %37 = vset.pattern.permute.xlu0 0
    %38 = vperm.xlu0 %37, %v22
    %v39 = vpop.permute.xlu0 %38
    %42 = vset.pattern.permute.xlu0 0
    %43 = vperm.xlu0 %42, %v23
    %v44 = vpop.permute.xlu0 %43
    %47 = vset.pattern.permute.xlu0 0
    %48 = vperm.xlu0 %47, %v24
    %v49 = vpop.permute.xlu0 %48
    %52 = vset.pattern.permute.xlu0 0
    %53 = vperm.xlu0 %52, %v25
    %v54 = vpop.permute.xlu0 %53
    %v56 = vlaneseq
    %v57 = vshrl.u32 %v56, 7
    %v58 = vsub.s32 0, %v57
    %v59 = vrot.slane %v35, %v58
    %v60 = vmul.f32 %v39, %v59
    %v61 = vmul.f32 %v44, %v59
    %v62 = vmul.f32 %v49, %v59
    %v63 = vmul.f32 %v54, %v59
    %65 = vset.pattern.permute.xlu0 0
    %66 = vperm.xlu0 %65, %v26
    %v67 = vpop.permute.xlu0 %66
    %70 = vset.pattern.permute.xlu0 0
    %71 = vperm.xlu0 %70, %v27
    %v72 = vpop.permute.xlu0 %71
    %75 = vset.pattern.permute.xlu0 0
    %76 = vperm.xlu0 %75, %v28
    %v77 = vpop.permute.xlu0 %76
    %80 = vset.pattern.permute.xlu0 0
    %81 = vperm.xlu0 %80, %v29
    %v82 = vpop.permute.xlu0 %81
    %v84 = vadd.f32 %v67, %v60
    %v85 = vadd.f32 %v72, %v61
    %v86 = vadd.f32 %v77, %v62
    %v87 = vadd.f32 %v82, %v63
    %v88 = vld [vmem:[%s0 + $0x1] sm:$0x1]
    %89 = vset.pattern.permute.xlu0 1
    %90 = vperm.xlu0 %89, %v22
    %v91 = vpop.permute.xlu0 %90
    %93 = vset.pattern.permute.xlu0 1
    %94 = vperm.xlu0 %93, %v23
    %v95 = vpop.permute.xlu0 %94
    %97 = vset.pattern.permute.xlu0 1
    %98 = vperm.xlu0 %97, %v24
    %v99 = vpop.permute.xlu0 %98
    %101 = vset.pattern.permute.xlu0 1
    %102 = vperm.xlu0 %101, %v25
    %v103 = vpop.permute.xlu0 %102
    %v105 = vlaneseq
    %v106 = vshrl.u32 %v105, 7
    %v107 = vsub.s32 0, %v106
    %v108 = vrot.slane %v88, %v107
    %v109 = vmul.f32 %v91, %v108
    %v110 = vmul.f32 %v95, %v108
    %v111 = vmul.f32 %v99, %v108
    %v112 = vmul.f32 %v103, %v108
    %v113 = vadd.f32 %v84, %v109
    %v114 = vadd.f32 %v85, %v110
    %v115 = vadd.f32 %v86, %v111
    %v116 = vadd.f32 %v87, %v112
    %v117 = vld [vmem:[%s0 + $0x2] sm:$0x1]
    %118 = vset.pattern.permute.xlu0 2
    %119 = vperm.xlu0 %118, %v22
    %v120 = vpop.permute.xlu0 %119
    %122 = vset.pattern.permute.xlu0 2
    %123 = vperm.xlu0 %122, %v23
    %v124 = vpop.permute.xlu0 %123
    %126 = vset.pattern.permute.xlu0 2
    %127 = vperm.xlu0 %126, %v24
    %v128 = vpop.permute.xlu0 %127
    %130 = vset.pattern.permute.xlu0 2
    %131 = vperm.xlu0 %130, %v25
    %v132 = vpop.permute.xlu0 %131
    %v134 = vlaneseq
    %v135 = vshrl.u32 %v134, 7
    %v136 = vsub.s32 0, %v135
    %v137 = vrot.slane %v117, %v136
    %v138 = vmul.f32 %v120, %v137
    %v139 = vmul.f32 %v124, %v137
    %v140 = vmul.f32 %v128, %v137
    %v141 = vmul.f32 %v132, %v137
    %v142 = vadd.f32 %v113, %v138
    %v143 = vadd.f32 %v114, %v139
    %v144 = vadd.f32 %v115, %v140
    %v145 = vadd.f32 %v116, %v141
    %v146 = vld [vmem:[%s0 + $0x3] sm:$0x1]
    %147 = vset.pattern.permute.xlu0 3
    %148 = vperm.xlu0 %147, %v22
    %v149 = vpop.permute.xlu0 %148
    %151 = vset.pattern.permute.xlu0 3
    %152 = vperm.xlu0 %151, %v23
    %v153 = vpop.permute.xlu0 %152
    %155 = vset.pattern.permute.xlu0 3
    %156 = vperm.xlu0 %155, %v24
    %v157 = vpop.permute.xlu0 %156
    %159 = vset.pattern.permute.xlu0 3
    %160 = vperm.xlu0 %159, %v25
    %v161 = vpop.permute.xlu0 %160
    %v163 = vlaneseq
    %v164 = vshrl.u32 %v163, 7
    %v165 = vsub.s32 0, %v164
    %v166 = vrot.slane %v146, %v165
    %v167 = vmul.f32 %v149, %v166
    %v168 = vmul.f32 %v153, %v166
    %v169 = vmul.f32 %v157, %v166
    %v170 = vmul.f32 %v161, %v166
    %v171 = vadd.f32 %v142, %v167
    %v172 = vadd.f32 %v143, %v168
    %v173 = vadd.f32 %v144, %v169
    %v174 = vadd.f32 %v145, %v170
    %v175 = vmax.f32 %v171, 0.0
    %v176 = vmax.f32 %v172, 0.0
    %v177 = vmax.f32 %v173, 0.0
    %v178 = vmax.f32 %v174, 0.0
    %180 = vset.pattern.permute.xlu0 0
    %181 = vperm.xlu0 %180, %v30
    %v182 = vpop.permute.xlu0 %181
    %185 = vset.pattern.permute.xlu0 0
    %186 = vperm.xlu0 %185, %v31
    %v187 = vpop.permute.xlu0 %186
    %190 = vset.pattern.permute.xlu0 0
    %191 = vperm.xlu0 %190, %v32
    %v192 = vpop.permute.xlu0 %191
    %195 = vset.pattern.permute.xlu0 0
    %196 = vperm.xlu0 %195, %v33
    %v197 = vpop.permute.xlu0 %196
    %v199 = vmul.f32 %v175, %v182
    %v200 = vmul.f32 %v176, %v187
    %v201 = vmul.f32 %v177, %v192
    %v202 = vmul.f32 %v178, %v197
    %v203 = vadd.f32 %v199, %v200
    %v204 = vadd.f32 %v203, %v201
    %v205 = vadd.f32 %v204, %v202
    %v206 = vrot.slane %v205, 4
    %v207 = vadd.f32 %v205, %v206
    %v208 = vrot.slane %v207, 2
    %v209 = vadd.f32 %v207, %v208
    %v210 = vrot.slane %v209, 1
    %v211 = vadd.f32 %v209, %v210
    %v212 = vstv %s34
    %v213 = vadd.f32 %v211, %v212
    %214 = vst [vmem:[#allocation3] sm:$0x1] %v213
    // Predicated region
    $region22: #{tpu_custom_call.1} parent=1 // pred_check
      _
    $region23: #{tpu_custom_call.1} parent=1 // pred_check_branch
      %216 = sbr.rel (0) target = $region25
    $region24: #{tpu_custom_call.1} parent=1 // pred_region
      %s218 = ssub.s32 16, 16
      %219 = vsyncadd [#allocation4], %s218
      %s221 = sshll.u32 [#allocation3], 4
      %s222 = int_to_ptr.vmem [resolvable:$true] %s221
      %224 = dma.vmem_to_hbm [thread:$0]  %s222, 16, %s5, [#allocation4]
    $region25: #{tpu_custom_call.1} parent=1 // pred_fallthru
      _
    // Predicated region
    $region26: #{tpu_custom_call.1} parent=1 // pred_check
      _
    $region27: #{tpu_custom_call.1} parent=1 // pred_check_branch
      %226 = sbr.rel (0) target = $region29
    $region28: #{tpu_custom_call.1} parent=1 // pred_region
      %227 = dma.done [#allocation4], 16
    $region29: #{tpu_custom_call.1} parent=1 // pred_fallthru
      _
    %228 = vsyncpa [#allocation4], 1

</llo_original>
